<compile_context>
chip_gen: v7x
topology: tpu7x:2x2x1
jax: 0.10.0
libtpu: 0.0.40
codegen_flags: <defaults>
</compile_context>

<pallas_src>
import functools

import jax
import jax.numpy as jnp
from jax import lax
from jax.experimental import pallas as pl
from jax.experimental.pallas import tpu as pltpu


def _round_up(x, m):
    return -(-x // m) * m


# ----------------------------------------------------------------------------
# Pallas kernel: single-matmul 3x3 conv (from im2col) + bias + ReLU
#                + global-avg-pool (sum; mean folded into w2) + linear decoder
# ----------------------------------------------------------------------------
def single_kernel(x_ref, w1_ref, b1_ref, w2_ref, b2_ref, out_ref):
    # x_ref : (tn*H*W, K_pad)  lane-dense im2col tile (f32 or bf16)
    # w1_ref: (K_pad, F_pad)   conv weight (same dtype as x)
    # b1_ref: (1, F_pad)       conv bias (f32)
    # w2_ref: (F_pad, NC_pad)  decoder weight with 1/(H*W) folded in (f32)
    # b2_ref: (1, NC_pad)      decoder bias (f32)
    # out_ref: (tn, NC_pad)    logits
    tn = out_ref.shape[0]
    m = x_ref.shape[0]
    hw = m // tn
    f_pad = b1_ref.shape[1]

    # One MXU matmul; accumulation happens inside the MXU in f32.
    conv = jnp.dot(x_ref[...], w1_ref[...],
                   preferred_element_type=jnp.float32)           # (M, F_pad)

    # Bias + ReLU on a lane-dense (M, 128) tile (f32 epilogue).
    conv = jnp.maximum(conv + b1_ref[...], 0.0)

    # Global average pool: plain spatial sum (the 1/(H*W) lives in w2).
    feats = jnp.sum(conv.reshape(tn, hw, f_pad), axis=1)         # (tn, F_pad)

    # Linear decoder, lane-dense padded output.
    logits = jnp.dot(feats, w2_ref[...],
                     preferred_element_type=jnp.float32) + b2_ref[...]
    out_ref[...] = logits.astype(out_ref.dtype)


# ----------------------------------------------------------------------------
# Wrapper: layout glue (im2col, padding, weight packing) + pallas_call
# ----------------------------------------------------------------------------
@functools.partial(jax.jit, static_argnames=("batch_tile", "use_bf16"))
def single_forward(x_nchw, conv_w, conv_b, fc_w, fc_b, *,
                   batch_tile=32, use_bf16=False):
    """Forward pass of the `Single` module.

    x_nchw : (N, C, H, W)   float32  (PyTorch NCHW convention)
    conv_w : (F, C, 3, 3)   PyTorch Conv2d weight layout
    conv_b : (F,)
    fc_w   : (NC, F)        PyTorch nn.Linear weight layout
    fc_b   : (NC,)
    returns logits (N, NC) float32
    """
    N, C, H, W = x_nchw.shape
    F = conv_w.shape[0]
    NC = fc_w.shape[0]
    HW = H * W
    K = 9 * C

    k_pad = _round_up(K, 128)                # lane-dense contraction width
    f_pad = _round_up(F, 128)                # lane-dense conv feature width
    nc_pad = _round_up(NC, 128)              # lane-dense logit width

    # Batch tile: whole batch if tiny; otherwise a multiple of 8, capped so
    # the grid always has >= 2 steps (keeps both v7x TensorCores busy).
    if N <= 8:
        tn = N
    else:
        half = _round_up(-(-N // 2), 8)      # ceil(N/2), rounded up to 8
        tn = min(_round_up(batch_tile, 8), half)
    n_pad = _round_up(N, tn)

    mm_dtype = jnp.bfloat16 if use_bf16 else jnp.float32

    # ---- layout glue (im2col; all hot-path compute stays in the kernel) ----
    x_nhwc = jnp.transpose(x_nchw, (0, 2, 3, 1))                 # NCHW -> NHWC
    x_nhwc = jnp.pad(x_nhwc, ((0, n_pad - N), (0, 0), (0, 0), (0, 0)))
    x_sp = jnp.pad(x_nhwc, ((0, 0), (1, 1), (1, 1), (0, 0)))     # spatial pad
    patches = [x_sp[:, kh:kh + H, kw:kw + W, :]
               for kh in range(3) for kw in range(3)]            # 9 x (n,H,W,C)
    x_cols = jnp.stack(patches, axis=3).reshape(n_pad * HW, K)   # (M, 9C)
    x_cols = jnp.pad(x_cols, ((0, 0), (0, k_pad - K))).astype(mm_dtype)

    # Conv weight (F, C, 3, 3) -> (kh, kw, C, F) -> (9C, F), lane-dense pad.
    w1 = jnp.transpose(conv_w, (2, 3, 1, 0)).reshape(K, F)
    w1 = jnp.pad(w1, ((0, k_pad - K), (0, f_pad - F))).astype(mm_dtype)
    b1 = jnp.pad(conv_b, (0, f_pad - F)).reshape(1, f_pad).astype(jnp.float32)

    # Decoder weight with the 1/(H*W) mean folded in, zero-padded lane-dense.
    w2 = fc_w.T.astype(jnp.float32) * (1.0 / float(HW))          # (F, NC)
    w2 = jnp.pad(w2, ((0, f_pad - F), (0, nc_pad - NC)))
    b2 = jnp.pad(fc_b, (0, nc_pad - NC)).reshape(1, nc_pad).astype(jnp.float32)

    grid = (n_pad // tn,)

    out = pl.pallas_call(
        single_kernel,
        out_shape=jax.ShapeDtypeStruct((n_pad, nc_pad), jnp.float32),
        grid_spec=pltpu.PrefetchScalarGridSpec(
            num_scalar_prefetch=0,
            grid=grid,
            in_specs=[
                pl.BlockSpec((tn * HW, k_pad), lambda i: (i, 0)),
                pl.BlockSpec((k_pad, f_pad), lambda i: (0, 0)),
                pl.BlockSpec((1, f_pad), lambda i: (0, 0)),
                pl.BlockSpec((f_pad, nc_pad), lambda i: (0, 0)),
                pl.BlockSpec((1, nc_pad), lambda i: (0, 0)),
            ],
            out_specs=pl.BlockSpec((tn, nc_pad), lambda i: (i, 0)),
        ),
        compiler_params=pltpu.CompilerParams(
            dimension_semantics=("parallel",),       # megacore sharding on v7x
            vmem_limit_bytes=48 * 1024 * 1024,       # < 64 MiB (v7x physical)
        ),
    )(x_cols, w1, b1, w2, b2)

    return out[:N, :NC]


# ----------------------------------------------------------------------------
# Pure-JAX reference (independent path through lax.conv) for validation
# ----------------------------------------------------------------------------
def single_reference(x_nchw, conv_w, conv_b, fc_w, fc_b):
    conv = lax.conv_general_dilated(
        x_nchw, conv_w, window_strides=(1, 1), padding="SAME",
        dimension_numbers=("NCHW", "OIHW", "NCHW"))
    conv = jnp.maximum(conv + conv_b[None, :, None, None], 0.0)
    feats = jnp.mean(conv, axis=(2, 3))                          # (N, F)
    return feats @ fc_w.T + fc_b[None, :]


if __name__ == "__main__":
    key = jax.random.PRNGKey(0)
    k_x, k_cw, k_cb, k_fw, k_fb, k_x2, k_x3 = jax.random.split(key, 7)

    N, C, H, W = 2, 4, 16, 16
    F, NC = 32, 10

    x = jax.random.normal(k_x, (N, C, H, W), dtype=jnp.float32)

    # Deterministic parameter init (PyTorch-style uniform(+-1/sqrt(fan_in))).
    conv_fan_in = C * 3 * 3
    lim1 = 1.0 / conv_fan_in ** 0.5
    conv_w = jax.random.uniform(k_cw, (F, C, 3, 3), jnp.float32, -lim1, lim1)
    conv_b = jax.random.uniform(k_cb, (F,), jnp.float32, -lim1, lim1)
    lim2 = 1.0 / F ** 0.5
    fc_w = jax.random.uniform(k_fw, (NC, F), jnp.float32, -lim2, lim2)
    fc_b = jax.random.uniform(k_fb, (NC,), jnp.float32, -lim2, lim2)

    # 1) Small batch, single-tile path, exact f32.
    out = jax.block_until_ready(single_forward(x, conv_w, conv_b, fc_w, fc_b))
    ref = single_reference(x, conv_w, conv_b, fc_w, fc_b)
    assert out.shape == (N, NC)
    assert jnp.allclose(out, ref, rtol=1e-4, atol=1e-4), "mismatch (N=2, f32)"

    # 2) Tiled/pipelined path: batch 16 -> tn=8 -> grid of 2 steps, exact f32.
    x2 = jax.random.normal(k_x2, (16, C, H, W), dtype=jnp.float32)
    out2 = jax.block_until_ready(single_forward(x2, conv_w, conv_b, fc_w, fc_b))
    ref2 = single_reference(x2, conv_w, conv_b, fc_w, fc_b)
    assert out2.shape == (16, NC)
    assert jnp.allclose(out2, ref2, rtol=1e-4, atol=1e-4), "mismatch (N=16, f32)"

    # 3) Fat-tile bf16-operand path (v6e/v7x recommendation): batch 64 ->
    #    tn=32 -> grid of 2 steps; tolerance relaxed for bf16 matmul operands.
    x3 = jax.random.normal(k_x3, (64, C, H, W), dtype=jnp.float32)
    out3 = jax.block_until_ready(
        single_forward(x3, conv_w, conv_b, fc_w, fc_b, use_bf16=True))
    ref3 = single_reference(x3, conv_w, conv_b, fc_w, fc_b)
    assert out3.shape == (64, NC)
    assert jnp.allclose(out3, ref3, rtol=5e-2, atol=5e-2), "mismatch (N=64, bf16)"

    print("KERNEL_OK")
</pallas_src>

<mosaic_0001>
module attributes {stable_mosaic.version = 11 : i64} {
  func.func @single_kernel(%arg0: i32, %arg1: memref<512x128xf32, #tpu.memory_space<vmem>>, %arg2: memref<128x128xf32, #tpu.memory_space<vmem>>, %arg3: memref<1x128xf32, #tpu.memory_space<vmem>>, %arg4: memref<128x128xf32, #tpu.memory_space<vmem>>, %arg5: memref<1x128xf32, #tpu.memory_space<vmem>>, %arg6: memref<2x128xf32, #tpu.memory_space<vmem>>) attributes {dimension_semantics = [#tpu.dimension_semantics<parallel>], iteration_bounds = array<i64: 1>, scalar_prefetch = 0 : i64, scratch_operands = 0 : i64, tpu.core_type = #tpu.core_type<tc>, window_params = [{transform_indices = @transform_0, window_bounds = array<i64: 512, 128>}, {pipeline_mode = #tpu.pipeline_mode<synchronous>, transform_indices = @transform_1, window_bounds = array<i64: 128, 128>}, {pipeline_mode = #tpu.pipeline_mode<synchronous>, transform_indices = @transform_2, window_bounds = array<i64: 1, 128>}, {pipeline_mode = #tpu.pipeline_mode<synchronous>, transform_indices = @transform_3, window_bounds = array<i64: 128, 128>}, {pipeline_mode = #tpu.pipeline_mode<synchronous>, transform_indices = @transform_4, window_bounds = array<i64: 1, 128>}, {transform_indices = @transform_5, window_bounds = array<i64: 2, 128>}]} {
    %c0 = arith.constant 0 : index
    %c0_0 = arith.constant 0 : index
    %0 = vector.load %arg1[%c0, %c0_0] : memref<512x128xf32, #tpu.memory_space<vmem>>, vector<512x128xf32>
    %c0_1 = arith.constant 0 : index
    %c0_2 = arith.constant 0 : index
    %1 = vector.load %arg2[%c0_1, %c0_2] : memref<128x128xf32, #tpu.memory_space<vmem>>, vector<128x128xf32>
    %cst = arith.constant dense<0.000000e+00> : vector<512x128xf32>
    %2 = tpu.matmul %0, %1, %cst {dimension_numbers = #tpu.dot_dimension_numbers<[1], [0], [0], [1], [0, 0, 1, 1], [], []>} : vector<512x128xf32>, vector<128x128xf32>, vector<512x128xf32> -> vector<512x128xf32>
    %c0_3 = arith.constant 0 : index
    %c0_4 = arith.constant 0 : index
    %3 = vector.load %arg3[%c0_3, %c0_4] : memref<1x128xf32, #tpu.memory_space<vmem>>, vector<1x128xf32>
    %4 = vector.broadcast %3 : vector<1x128xf32> to vector<512x128xf32>
    %5 = arith.addf %2, %4 : vector<512x128xf32>
    %cst_5 = arith.constant 0.000000e+00 : f32
    %6 = vector.broadcast %cst_5 : f32 to vector<512x128xf32>
    %7 = arith.maximumf %5, %6 : vector<512x128xf32>
    %8 = vector.shape_cast %7 : vector<512x128xf32> to vector<2x256x128xf32>
    %cst_6 = arith.constant dense<0.000000e+00> : vector<2x128xf32>
    %9 = vector.multi_reduction <add>, %8, %cst_6 [1] : vector<2x256x128xf32> to vector<2x128xf32>
    %c0_7 = arith.constant 0 : index
    %c0_8 = arith.constant 0 : index
    %10 = vector.load %arg4[%c0_7, %c0_8] : memref<128x128xf32, #tpu.memory_space<vmem>>, vector<128x128xf32>
    %cst_9 = arith.constant dense<0.000000e+00> : vector<2x128xf32>
    %11 = tpu.matmul %9, %10, %cst_9 {dimension_numbers = #tpu.dot_dimension_numbers<[1], [0], [0], [1], [0, 0, 1, 1], [], []>} : vector<2x128xf32>, vector<128x128xf32>, vector<2x128xf32> -> vector<2x128xf32>
    %c0_10 = arith.constant 0 : index
    %c0_11 = arith.constant 0 : index
    %12 = vector.load %arg5[%c0_10, %c0_11] : memref<1x128xf32, #tpu.memory_space<vmem>>, vector<1x128xf32>
    %13 = vector.broadcast %12 : vector<1x128xf32> to vector<2x128xf32>
    %14 = arith.addf %11, %13 : vector<2x128xf32>
    %c0_12 = arith.constant 0 : index
    %c0_13 = arith.constant 0 : index
    %15 = vector.load %arg6[%c0_12, %c0_13] : memref<2x128xf32, #tpu.memory_space<vmem>>, vector<2x128xf32>
    tpu.vector_store %arg6[%c0_12, %c0_13], %14 {strides = array<i32>} : memref<2x128xf32, #tpu.memory_space<vmem>>, vector<2x128xf32>,
    return
  }
  func.func @transform_0(%arg0: i32) -> (i32, i32) {
    %c0_i32 = arith.constant 0 : i32
    %c0_i32_0 = arith.constant 0 : i32
    return %arg0, %c0_i32 : i32, i32
  }
  func.func @transform_1(%arg0: i32) -> (i32, i32) {
    %c0_i32 = arith.constant 0 : i32
    %c0_i32_0 = arith.constant 0 : i32
    %c0_i32_1 = arith.constant 0 : i32
    return %c0_i32, %c0_i32_0 : i32, i32
  }
  func.func @transform_2(%arg0: i32) -> (i32, i32) {
    %c0_i32 = arith.constant 0 : i32
    %c0_i32_0 = arith.constant 0 : i32
    %c0_i32_1 = arith.constant 0 : i32
    return %c0_i32, %c0_i32_0 : i32, i32
  }
  func.func @transform_3(%arg0: i32) -> (i32, i32) {
    %c0_i32 = arith.constant 0 : i32
    %c0_i32_0 = arith.constant 0 : i32
    %c0_i32_1 = arith.constant 0 : i32
    return %c0_i32, %c0_i32_0 : i32, i32
  }
  func.func @transform_4(%arg0: i32) -> (i32, i32) {
    %c0_i32 = arith.constant 0 : i32
    %c0_i32_0 = arith.constant 0 : i32
    %c0_i32_1 = arith.constant 0 : i32
    return %c0_i32, %c0_i32_0 : i32, i32
  }
  func.func @transform_5(%arg0: i32) -> (i32, i32) {
    %c0_i32 = arith.constant 0 : i32
    %c0_i32_0 = arith.constant 0 : i32
    return %arg0, %c0_i32 : i32, i32
  }
}

</mosaic_0001>

<llo_original>
// kernel: single_forward.1
$region0: #{single_forward.1}
  #allocation0 [shape = 'u32[]', space=smem, size = 0x4, offset = 0x4, fixed_abs, tag = 'smem constant byte address 0x4 - core index']
  #allocation1 [shape = 'u32[144,128]{1,0:T(1,128)}', space=vmem, size = 0x12000, scoped, tag = 'internal scratch']
  %s0 = inlined_call_operand.vmem [shape: f32[512,128], index: 0, kind: input, shape index: {}]
  %s1 = inlined_call_operand.vmem [shape: f32[128,128], index: 1, kind: input, shape index: {}]
  %s2 = inlined_call_operand.vmem [shape: f32[1,128], index: 2, kind: input, shape index: {}]
  %s3 = inlined_call_operand.vmem [shape: f32[128,128], index: 3, kind: input, shape index: {}]
  %s4 = inlined_call_operand.vmem [shape: f32[1,128], index: 4, kind: input, shape index: {}]
  %s5 = inlined_call_operand.hbm [shape: f32[2,128], index: 5, kind: output, shape index: {}]
  %s6 = sld [smem:[#allocation0]]
  $region30: #{single_forward.1} parent=0
    _
  %s8 = ssub.s32 1, %s6
  %s9 = scalar_select 0, %s8, %s6
  $region1: #{single_forward.1} parent=0
    #allocation2 [shape = 'u8[1024]{0}', space=vmem, size = 0x400, scoped, tag = 'output window, operand 0, single buffered']
    #allocation3 [shape = 's32[1]{0}', space=sflag, size = 0x4, scoped, tag = 'scoped memory for single_forward.1']
    %10 = vsyncpa [#allocation3], 0
    // Predicated region
    $region2: #{single_forward.1} parent=1 // pred_check
      _
    $region3: #{single_forward.1} parent=1 // pred_check_branch
      %12 = sbr.rel (0) target = $region5
    $region4: #{single_forward.1} parent=1 // pred_region
      _
    $region5: #{single_forward.1} parent=1 // pred_fallthru
      _
    // Predicated region
    $region6: #{single_forward.1} parent=1 // pred_check
      _
    $region7: #{single_forward.1} parent=1 // pred_check_branch
      %14 = sbr.rel (0) target = $region9
    $region8: #{single_forward.1} parent=1 // pred_region
      _
    $region9: #{single_forward.1} parent=1 // pred_fallthru
      _
    // Predicated region
    $region10: #{single_forward.1} parent=1 // pred_check
      _
    $region11: #{single_forward.1} parent=1 // pred_check_branch
      %16 = sbr.rel (0) target = $region13
    $region12: #{single_forward.1} parent=1 // pred_region
      _
    $region13: #{single_forward.1} parent=1 // pred_fallthru
      _
    // Predicated region
    $region14: #{single_forward.1} parent=1 // pred_check
      _
    $region15: #{single_forward.1} parent=1 // pred_check_branch
      %18 = sbr.rel (0) target = $region17
    $region16: #{single_forward.1} parent=1 // pred_region
      _
    $region17: #{single_forward.1} parent=1 // pred_fallthru
      _
    // Predicated region
    $region18: #{single_forward.1} parent=1 // pred_check
      _
    $region19: #{single_forward.1} parent=1 // pred_check_branch
      %20 = sbr.rel (0) target = $region21
    $region20: #{single_forward.1} parent=1 // pred_region
      _
    $region21: #{single_forward.1} parent=1 // pred_fallthru
      _
    %v21 = vld [vmem:[%s0] sm:$0xff]
    %v22 = vld [vmem:[%s0 + $0x8] sm:$0xff]
    %v23 = vld [vmem:[%s0 + $0x10] sm:$0xff]
    %v24 = vld [vmem:[%s0 + $0x18] sm:$0xff]
    %v25 = vld [vmem:[%s0 + $0x20] sm:$0xff]
    %v26 = vld [vmem:[%s0 + $0x28] sm:$0xff]
    %v27 = vld [vmem:[%s0 + $0x30] sm:$0xff]
    %v28 = vld [vmem:[%s0 + $0x38] sm:$0xff]
    %v29 = vld [vmem:[%s0 + $0x40] sm:$0xff]
    %v30 = vld [vmem:[%s0 + $0x48] sm:$0xff]
    %v31 = vld [vmem:[%s0 + $0x50] sm:$0xff]
    %v32 = vld [vmem:[%s0 + $0x58] sm:$0xff]
    %v33 = vld [vmem:[%s0 + $0x60] sm:$0xff]
    %v34 = vld [vmem:[%s0 + $0x68] sm:$0xff]
    %v35 = vld [vmem:[%s0 + $0x70] sm:$0xff]
    %v36 = vld [vmem:[%s0 + $0x78] sm:$0xff]
    %v37 = vld [vmem:[%s0 + $0x80] sm:$0xff]
    %v38 = vld [vmem:[%s0 + $0x88] sm:$0xff]
    %v39 = vld [vmem:[%s0 + $0x90] sm:$0xff]
    %v40 = vld [vmem:[%s0 + $0x98] sm:$0xff]
    %v41 = vld [vmem:[%s0 + $0xa0] sm:$0xff]
    %v42 = vld [vmem:[%s0 + $0xa8] sm:$0xff]
    %v43 = vld [vmem:[%s0 + $0xb0] sm:$0xff]
    %v44 = vld [vmem:[%s0 + $0xb8] sm:$0xff]
    %v45 = vld [vmem:[%s0 + $0xc0] sm:$0xff]
    %v46 = vld [vmem:[%s0 + $0xc8] sm:$0xff]
    %v47 = vld [vmem:[%s0 + $0xd0] sm:$0xff]
    %v48 = vld [vmem:[%s0 + $0xd8] sm:$0xff]
    %v49 = vld [vmem:[%s0 + $0xe0] sm:$0xff]
    %v50 = vld [vmem:[%s0 + $0xe8] sm:$0xff]
    %v51 = vld [vmem:[%s0 + $0xf0] sm:$0xff]
    %v52 = vld [vmem:[%s0 + $0xf8] sm:$0xff]
    %v53 = vld [vmem:[%s0 + $0x100] sm:$0xff]
    %v54 = vld [vmem:[%s0 + $0x108] sm:$0xff]
    %v55 = vld [vmem:[%s0 + $0x110] sm:$0xff]
    %v56 = vld [vmem:[%s0 + $0x118] sm:$0xff]
    %v57 = vld [vmem:[%s0 + $0x120] sm:$0xff]
    %v58 = vld [vmem:[%s0 + $0x128] sm:$0xff]
    %v59 = vld [vmem:[%s0 + $0x130] sm:$0xff]
    %v60 = vld [vmem:[%s0 + $0x138] sm:$0xff]
    %v61 = vld [vmem:[%s0 + $0x140] sm:$0xff]
    %v62 = vld [vmem:[%s0 + $0x148] sm:$0xff]
    %v63 = vld [vmem:[%s0 + $0x150] sm:$0xff]
    %v64 = vld [vmem:[%s0 + $0x158] sm:$0xff]
    %v65 = vld [vmem:[%s0 + $0x160] sm:$0xff]
    %v66 = vld [vmem:[%s0 + $0x168] sm:$0xff]
    %v67 = vld [vmem:[%s0 + $0x170] sm:$0xff]
    %v68 = vld [vmem:[%s0 + $0x178] sm:$0xff]
    %v69 = vld [vmem:[%s0 + $0x180] sm:$0xff]
    %v70 = vld [vmem:[%s0 + $0x188] sm:$0xff]
    %v71 = vld [vmem:[%s0 + $0x190] sm:$0xff]
    %v72 = vld [vmem:[%s0 + $0x198] sm:$0xff]
    %v73 = vld [vmem:[%s0 + $0x1a0] sm:$0xff]
    %v74 = vld [vmem:[%s0 + $0x1a8] sm:$0xff]
    %v75 = vld [vmem:[%s0 + $0x1b0] sm:$0xff]
    %v76 = vld [vmem:[%s0 + $0x1b8] sm:$0xff]
    %v77 = vld [vmem:[%s0 + $0x1c0] sm:$0xff]
    %v78 = vld [vmem:[%s0 + $0x1c8] sm:$0xff]
    %v79 = vld [vmem:[%s0 + $0x1d0] sm:$0xff]
    %v80 = vld [vmem:[%s0 + $0x1d8] sm:$0xff]
    %v81 = vld [vmem:[%s0 + $0x1e0] sm:$0xff]
    %v82 = vld [vmem:[%s0 + $0x1e8] sm:$0xff]
    %v83 = vld [vmem:[%s0 + $0x1f0] sm:$0xff]
    %v84 = vld [vmem:[%s0 + $0x1f8] sm:$0xff]
    %v85 = vld [vmem:[%s1] sm:$0xff]
    %v86 = vld [vmem:[%s1 + $0x8] sm:$0xff]
    %v87 = vld [vmem:[%s1 + $0x10] sm:$0xff]
    %v88 = vld [vmem:[%s1 + $0x18] sm:$0xff]
    %v89 = vld [vmem:[%s1 + $0x20] sm:$0xff]
    %v90 = vld [vmem:[%s1 + $0x28] sm:$0xff]
    %v91 = vld [vmem:[%s1 + $0x30] sm:$0xff]
    %v92 = vld [vmem:[%s1 + $0x38] sm:$0xff]
    %v93 = vld [vmem:[%s1 + $0x40] sm:$0xff]
    %v94 = vld [vmem:[%s1 + $0x48] sm:$0xff]
    %v95 = vld [vmem:[%s1 + $0x50] sm:$0xff]
    %v96 = vld [vmem:[%s1 + $0x58] sm:$0xff]
    %v97 = vld [vmem:[%s1 + $0x60] sm:$0xff]
    %v98 = vld [vmem:[%s1 + $0x68] sm:$0xff]
    %v99 = vld [vmem:[%s1 + $0x70] sm:$0xff]
    %v100 = vld [vmem:[%s1 + $0x78] sm:$0xff]
    %v101 = vld [vmem:[%s2] sm:$0x1]
    %v103 = vlaneseq
    %v104 = vshrl.u32 %v103, 7
    %v105 = vsub.s32 0, %v104
    %v106 = vrot.slane %v101, %v105
    %108 = vmatprep.subr.mxu0 0.0
    %109 = vmatpush1.msra.mxu0 %v85
    %110 = vmatprep.subr.mxu0 0.0
    %111 = vmatpush1.msra.mxu0 %v86
    %112 = vmatprep.subr.mxu0 0.0
    %113 = vmatpush1.msra.mxu0 %v87
    %114 = vmatprep.subr.mxu0 0.0
    %115 = vmatpush1.msra.mxu0 %v88
    %116 = vmatprep.subr.mxu0 0.0
    %117 = vmatpush1.msra.mxu0 %v89
    %118 = vmatprep.subr.mxu0 0.0
    %119 = vmatpush1.msra.mxu0 %v90
    %120 = vmatprep.subr.mxu0 0.0
    %121 = vmatpush1.msra.mxu0 %v91
    %122 = vmatprep.subr.mxu0 0.0
    %123 = vmatpush1.msra.mxu0 %v92
    %124 = vmatprep.subr.mxu0 0.0
    %125 = vmatpush1.msra.mxu0 %v93
    %126 = vmatprep.subr.mxu0 0.0
    %127 = vmatpush1.msra.mxu0 %v94
    %128 = vmatprep.subr.mxu0 0.0
    %129 = vmatpush1.msra.mxu0 %v95
    %130 = vmatprep.subr.mxu0 0.0
    %131 = vmatpush1.msra.mxu0 %v96
    %132 = vmatprep.subr.mxu0 0.0
    %133 = vmatpush1.msra.mxu0 %v97
    %134 = vmatprep.subr.mxu0 0.0
    %135 = vmatpush1.msra.mxu0 %v98
    %136 = vmatprep.subr.mxu0 0.0
    %137 = vmatpush1.msra.mxu0 %v99
    %138 = vmatprep.subr.mxu0 0.0
    %139 = vmatpush1.msra.mxu0 %v100
    %140 = vmatprep.subr.mxu0 0.0
    %141 = vmatpush1.msra.mxu0 0.0
    %142 = vmatprep.subr.mxu0 0.0
    %143 = vmatpush1.msra.mxu0 0.0
    %144 = vmatprep.subr.mxu0 0.0
    %145 = vmatpush1.msra.mxu0 0.0
    %146 = vmatprep.subr.mxu0 0.0
    %147 = vmatpush1.msra.mxu0 0.0
    %148 = vmatprep.subr.mxu0 0.0
    %149 = vmatpush1.msra.mxu0 0.0
    %150 = vmatprep.subr.mxu0 0.0
    %151 = vmatpush1.msra.mxu0 0.0
    %152 = vmatprep.subr.mxu0 0.0
    %153 = vmatpush1.msra.mxu0 0.0
    %154 = vmatprep.subr.mxu0 0.0
    %155 = vmatpush1.msra.mxu0 0.0
    %156 = vmatprep.subr.mxu0 0.0
    %157 = vmatpush1.msra.mxu0 0.0
    %158 = vmatprep.subr.mxu0 0.0
    %159 = vmatpush1.msra.mxu0 0.0
    %160 = vmatprep.subr.mxu0 0.0
    %161 = vmatpush1.msra.mxu0 0.0
    %162 = vmatprep.subr.mxu0 0.0
    %163 = vmatpush1.msra.mxu0 0.0
    %164 = vmatprep.subr.mxu0 0.0
    %165 = vmatpush1.msra.mxu0 0.0
    %166 = vmatprep.subr.mxu0 0.0
    %167 = vmatpush1.msra.mxu0 0.0
    %168 = vmatprep.subr.mxu0 0.0
    %169 = vmatpush1.msra.mxu0 0.0
    %170 = vmatprep.subr.mxu0 0.0
    %171 = vmatpush1.msra.mxu0 0.0
    %172 = vmatprep.mubr.f32.mxu0 0.0
    %173 = vmatmul.mubr.f32.gmra.mrb[0].mxu0 %v21
    %v174 = vpop.f32.mrb[0].mxu0
    %v175 = vadd.f32 %v106, %v174
    %v176 = vpop.f32.mrb[0].mxu0
    %177 = vmatprep.mubr.f32.mxu0 0.0
    %178 = vmatmul.mubr.f32.gmra.mrb[0].mxu0 %v22
    %v179 = vpop.f32.mrb[0].mxu0
    %v180 = vadd.f32 %v106, %v179
    %v181 = vpop.f32.mrb[0].mxu0
    %182 = vmatprep.mubr.f32.mxu0 0.0
    %183 = vmatmul.mubr.f32.gmra.mrb[0].mxu0 %v23
    %v184 = vpop.f32.mrb[0].mxu0
    %v185 = vadd.f32 %v106, %v184
    %v186 = vpop.f32.mrb[0].mxu0
    %187 = vmatprep.mubr.f32.mxu0 0.0
    %188 = vmatmul.mubr.f32.gmra.mrb[0].mxu0 %v24
    %v189 = vpop.f32.mrb[0].mxu0
    %v190 = vadd.f32 %v106, %v189
    %v191 = vpop.f32.mrb[0].mxu0
    %192 = vmatprep.mubr.f32.mxu0 0.0
    %193 = vmatmul.mubr.f32.gmra.mrb[0].mxu0 %v25
    %v194 = vpop.f32.mrb[0].mxu0
    %v195 = vadd.f32 %v106, %v194
    %v196 = vpop.f32.mrb[0].mxu0
    %197 = vmatprep.mubr.f32.mxu0 0.0
    %198 = vmatmul.mubr.f32.gmra.mrb[0].mxu0 %v26
    %v199 = vpop.f32.mrb[0].mxu0
    %v200 = vadd.f32 %v106, %v199
    %v201 = vpop.f32.mrb[0].mxu0
    %202 = vmatprep.mubr.f32.mxu0 0.0
    %203 = vmatmul.mubr.f32.gmra.mrb[0].mxu0 %v27
    %v204 = vpop.f32.mrb[0].mxu0
    %v205 = vadd.f32 %v106, %v204
    %v206 = vpop.f32.mrb[0].mxu0
    %207 = vmatprep.mubr.f32.mxu0 0.0
    %208 = vmatmul.mubr.f32.gmra.mrb[0].mxu0 %v28
    %v209 = vpop.f32.mrb[0].mxu0
    %v210 = vadd.f32 %v106, %v209
    %v211 = vpop.f32.mrb[0].mxu0
    %212 = vmatprep.mubr.f32.mxu0 0.0
    %213 = vmatmul.mubr.f32.gmra.mrb[0].mxu0 %v29
    %v214 = vpop.f32.mrb[0].mxu0
    %v215 = vadd.f32 %v106, %v214
    %v216 = vpop.f32.mrb[0].mxu0
    %217 = vmatprep.mubr.f32.mxu0 0.0
    %218 = vmatmul.mubr.f32.gmra.mrb[0].mxu0 %v30
    %v219 = vpop.f32.mrb[0].mxu0
    %v220 = vadd.f32 %v106, %v219
    %v221 = vpop.f32.mrb[0].mxu0
    %222 = vmatprep.mubr.f32.mxu0 0.0
    %223 = vmatmul.mubr.f32.gmra.mrb[0].mxu0 %v31
    %v224 = vpop.f32.mrb[0].mxu0
    %v225 = vadd.f32 %v106, %v224
    %v226 = vpop.f32.mrb[0].mxu0
    %227 = vmatprep.mubr.f32.mxu0 0.0
    %228 = vmatmul.mubr.f32.gmra.mrb[0].mxu0 %v32
    %v229 = vpop.f32.mrb[0].mxu0
    %v230 = vadd.f32 %v106, %v229
    %v231 = vpop.f32.mrb[0].mxu0
    %232 = vmatprep.mubr.f32.mxu0 0.0
    %233 = vmatmul.mubr.f32.gmra.mrb[0].mxu0 %v33
    %v234 = vpop.f32.mrb[0].mxu0
    %v235 = vadd.f32 %v106, %v234
    %v236 = vpop.f32.mrb[0].mxu0
    %237 = vmatprep.mubr.f32.mxu0 0.0
    %238 = vmatmul.mubr.f32.gmra.mrb[0].mxu0 %v34
    %v239 = vpop.f32.mrb[0].mxu0
    %v240 = vadd.f32 %v106, %v239
    %v241 = vpop.f32.mrb[0].mxu0
    %242 = vmatprep.mubr.f32.mxu0 0.0
    %243 = vmatmul.mubr.f32.gmra.mrb[0].mxu0 %v35
    %v244 = vpop.f32.mrb[0].mxu0
    %v245 = vadd.f32 %v106, %v244
    %v246 = vpop.f32.mrb[0].mxu0
    %247 = vmatprep.mubr.f32.mxu0 0.0
    %248 = vmatmul.mubr.f32.gmra.mrb[0].mxu0 %v36
    %v249 = vpop.f32.mrb[0].mxu0
    %v250 = vadd.f32 %v106, %v249
    %v251 = vpop.f32.mrb[0].mxu0
    %252 = vmatprep.mubr.f32.mxu0 0.0
    %253 = vmatmul.mubr.f32.gmra.mrb[0].mxu0 %v37
    %v254 = vpop.f32.mrb[0].mxu0
    %v255 = vadd.f32 %v106, %v254
    %v256 = vpop.f32.mrb[0].mxu0
    %257 = vmatprep.mubr.f32.mxu0 0.0
    %258 = vmatmul.mubr.f32.gmra.mrb[0].mxu0 %v38
    %v259 = vpop.f32.mrb[0].mxu0
    %v260 = vadd.f32 %v106, %v259
    %v261 = vpop.f32.mrb[0].mxu0
    %262 = vmatprep.mubr.f32.mxu0 0.0
    %263 = vmatmul.mubr.f32.gmra.mrb[0].mxu0 %v39
    %v264 = vpop.f32.mrb[0].mxu0
    %v265 = vadd.f32 %v106, %v264
    %v266 = vpop.f32.mrb[0].mxu0
    %267 = vmatprep.mubr.f32.mxu0 0.0
    %268 = vmatmul.mubr.f32.gmra.mrb[0].mxu0 %v40
    %v269 = vpop.f32.mrb[0].mxu0
    %v270 = vadd.f32 %v106, %v269
    %v271 = vpop.f32.mrb[0].mxu0
    %272 = vmatprep.mubr.f32.mxu0 0.0
    %273 = vmatmul.mubr.f32.gmra.mrb[0].mxu0 %v41
    %v274 = vpop.f32.mrb[0].mxu0
    %v275 = vadd.f32 %v106, %v274
    %v276 = vpop.f32.mrb[0].mxu0
    %277 = vmatprep.mubr.f32.mxu0 0.0
    %278 = vmatmul.mubr.f32.gmra.mrb[0].mxu0 %v42
    %v279 = vpop.f32.mrb[0].mxu0
    %v280 = vadd.f32 %v106, %v279
    %v281 = vpop.f32.mrb[0].mxu0
    %282 = vmatprep.mubr.f32.mxu0 0.0
    %283 = vmatmul.mubr.f32.gmra.mrb[0].mxu0 %v43
    %v284 = vpop.f32.mrb[0].mxu0
    %v285 = vadd.f32 %v106, %v284
    %v286 = vpop.f32.mrb[0].mxu0
    %287 = vmatprep.mubr.f32.mxu0 0.0
    %288 = vmatmul.mubr.f32.gmra.mrb[0].mxu0 %v44
    %v289 = vpop.f32.mrb[0].mxu0
    %v290 = vadd.f32 %v106, %v289
    %v291 = vpop.f32.mrb[0].mxu0
    %292 = vmatprep.mubr.f32.mxu0 0.0
    %293 = vmatmul.mubr.f32.gmra.mrb[0].mxu0 %v45
    %v294 = vpop.f32.mrb[0].mxu0
    %v295 = vadd.f32 %v106, %v294
    %v296 = vpop.f32.mrb[0].mxu0
    %297 = vmatprep.mubr.f32.mxu0 0.0
    %298 = vmatmul.mubr.f32.gmra.mrb[0].mxu0 %v46
    %v299 = vpop.f32.mrb[0].mxu0
    %v300 = vadd.f32 %v106, %v299
    %v301 = vpop.f32.mrb[0].mxu0
    %302 = vmatprep.mubr.f32.mxu0 0.0
    %303 = vmatmul.mubr.f32.gmra.mrb[0].mxu0 %v47
    %v304 = vpop.f32.mrb[0].mxu0
    %v305 = vadd.f32 %v106, %v304
    %v306 = vpop.f32.mrb[0].mxu0
    %307 = vmatprep.mubr.f32.mxu0 0.0
    %308 = vmatmul.mubr.f32.gmra.mrb[0].mxu0 %v48
    %v309 = vpop.f32.mrb[0].mxu0
    %v310 = vadd.f32 %v106, %v309
    %v311 = vpop.f32.mrb[0].mxu0
    %312 = vmatprep.mubr.f32.mxu0 0.0
    %313 = vmatmul.mubr.f32.gmra.mrb[0].mxu0 %v49
    %v314 = vpop.f32.mrb[0].mxu0
    %v315 = vadd.f32 %v106, %v314
    %v316 = vpop.f32.mrb[0].mxu0
    %317 = vmatprep.mubr.f32.mxu0 0.0
    %318 = vmatmul.mubr.f32.gmra.mrb[0].mxu0 %v50
    %v319 = vpop.f32.mrb[0].mxu0
    %v320 = vadd.f32 %v106, %v319
    %v321 = vpop.f32.mrb[0].mxu0
    %322 = vmatprep.mubr.f32.mxu0 0.0
    %323 = vmatmul.mubr.f32.gmra.mrb[0].mxu0 %v51
    %v324 = vpop.f32.mrb[0].mxu0
    %v325 = vadd.f32 %v106, %v324
    %v326 = vpop.f32.mrb[0].mxu0
    %327 = vmatprep.mubr.f32.mxu0 0.0
    %328 = vmatmul.mubr.f32.gmra.mrb[0].mxu0 %v52
    %v329 = vpop.f32.mrb[0].mxu0
    %v330 = vadd.f32 %v106, %v329
    %v331 = vpop.f32.mrb[0].mxu0
    %332 = vmatprep.mubr.f32.mxu0 0.0
    %333 = vmatmul.mubr.f32.gmra.mrb[0].mxu0 %v53
    %v334 = vpop.f32.mrb[0].mxu0
    %v335 = vadd.f32 %v106, %v334
    %v336 = vpop.f32.mrb[0].mxu0
    %337 = vmatprep.mubr.f32.mxu0 0.0
    %338 = vmatmul.mubr.f32.gmra.mrb[0].mxu0 %v54
    %v339 = vpop.f32.mrb[0].mxu0
    %v340 = vadd.f32 %v106, %v339
    %v341 = vpop.f32.mrb[0].mxu0
    %342 = vmatprep.mubr.f32.mxu0 0.0
    %343 = vmatmul.mubr.f32.gmra.mrb[0].mxu0 %v55
    %v344 = vpop.f32.mrb[0].mxu0
    %v345 = vadd.f32 %v106, %v344
    %v346 = vpop.f32.mrb[0].mxu0
    %347 = vmatprep.mubr.f32.mxu0 0.0
    %348 = vmatmul.mubr.f32.gmra.mrb[0].mxu0 %v56
    %v349 = vpop.f32.mrb[0].mxu0
    %v350 = vadd.f32 %v106, %v349
    %v351 = vpop.f32.mrb[0].mxu0
    %352 = vmatprep.mubr.f32.mxu0 0.0
    %353 = vmatmul.mubr.f32.gmra.mrb[0].mxu0 %v57
    %v354 = vpop.f32.mrb[0].mxu0
    %v355 = vadd.f32 %v106, %v354
    %v356 = vpop.f32.mrb[0].mxu0
    %357 = vmatprep.mubr.f32.mxu0 0.0
    %358 = vmatmul.mubr.f32.gmra.mrb[0].mxu0 %v58
    %v359 = vpop.f32.mrb[0].mxu0
    %v360 = vadd.f32 %v106, %v359
    %v361 = vpop.f32.mrb[0].mxu0
    %362 = vmatprep.mubr.f32.mxu0 0.0
    %363 = vmatmul.mubr.f32.gmra.mrb[0].mxu0 %v59
    %v364 = vpop.f32.mrb[0].mxu0
    %v365 = vadd.f32 %v106, %v364
    %v366 = vpop.f32.mrb[0].mxu0
    %367 = vmatprep.mubr.f32.mxu0 0.0
    %368 = vmatmul.mubr.f32.gmra.mrb[0].mxu0 %v60
    %v369 = vpop.f32.mrb[0].mxu0
    %v370 = vadd.f32 %v106, %v369
    %v371 = vpop.f32.mrb[0].mxu0
    %372 = vmatprep.mubr.f32.mxu0 0.0
    %373 = vmatmul.mubr.f32.gmra.mrb[0].mxu0 %v61
    %v374 = vpop.f32.mrb[0].mxu0
    %v375 = vadd.f32 %v106, %v374
    %v376 = vpop.f32.mrb[0].mxu0
    %377 = vmatprep.mubr.f32.mxu0 0.0
    %378 = vmatmul.mubr.f32.gmra.mrb[0].mxu0 %v62
    %v379 = vpop.f32.mrb[0].mxu0
    %v380 = vadd.f32 %v106, %v379
    %v381 = vpop.f32.mrb[0].mxu0
    %382 = vmatprep.mubr.f32.mxu0 0.0
    %383 = vmatmul.mubr.f32.gmra.mrb[0].mxu0 %v63
    %v384 = vpop.f32.mrb[0].mxu0
    %v385 = vadd.f32 %v106, %v384
    %v386 = vpop.f32.mrb[0].mxu0
    %387 = vmatprep.mubr.f32.mxu0 0.0
    %388 = vmatmul.mubr.f32.gmra.mrb[0].mxu0 %v64
    %v389 = vpop.f32.mrb[0].mxu0
    %v390 = vadd.f32 %v106, %v389
    %v391 = vpop.f32.mrb[0].mxu0
    %392 = vmatprep.mubr.f32.mxu0 0.0
    %393 = vmatmul.mubr.f32.gmra.mrb[0].mxu0 %v65
    %v394 = vpop.f32.mrb[0].mxu0
    %v395 = vadd.f32 %v106, %v394
    %v396 = vpop.f32.mrb[0].mxu0
    %397 = vmatprep.mubr.f32.mxu0 0.0
    %398 = vmatmul.mubr.f32.gmra.mrb[0].mxu0 %v66
    %v399 = vpop.f32.mrb[0].mxu0
    %v400 = vadd.f32 %v106, %v399
    %v401 = vpop.f32.mrb[0].mxu0
    %402 = vmatprep.mubr.f32.mxu0 0.0
    %403 = vmatmul.mubr.f32.gmra.mrb[0].mxu0 %v67
    %v404 = vpop.f32.mrb[0].mxu0
    %v405 = vadd.f32 %v106, %v404
    %v406 = vpop.f32.mrb[0].mxu0
    %407 = vmatprep.mubr.f32.mxu0 0.0
    %408 = vmatmul.mubr.f32.gmra.mrb[0].mxu0 %v68
    %v409 = vpop.f32.mrb[0].mxu0
    %v410 = vadd.f32 %v106, %v409
    %v411 = vpop.f32.mrb[0].mxu0
    %412 = vmatprep.mubr.f32.mxu0 0.0
    %413 = vmatmul.mubr.f32.gmra.mrb[0].mxu0 %v69
    %v414 = vpop.f32.mrb[0].mxu0
    %v415 = vadd.f32 %v106, %v414
    %v416 = vpop.f32.mrb[0].mxu0
    %417 = vmatprep.mubr.f32.mxu0 0.0
    %418 = vmatmul.mubr.f32.gmra.mrb[0].mxu0 %v70
    %v419 = vpop.f32.mrb[0].mxu0
    %v420 = vadd.f32 %v106, %v419
    %v421 = vpop.f32.mrb[0].mxu0
    %422 = vmatprep.mubr.f32.mxu0 0.0
    %423 = vmatmul.mubr.f32.gmra.mrb[0].mxu0 %v71
    %v424 = vpop.f32.mrb[0].mxu0
    %v425 = vadd.f32 %v106, %v424
    %v426 = vpop.f32.mrb[0].mxu0
    %427 = vmatprep.mubr.f32.mxu0 0.0
    %428 = vmatmul.mubr.f32.gmra.mrb[0].mxu0 %v72
    %v429 = vpop.f32.mrb[0].mxu0
    %v430 = vadd.f32 %v106, %v429
    %v431 = vpop.f32.mrb[0].mxu0
    %432 = vmatprep.mubr.f32.mxu0 0.0
    %433 = vmatmul.mubr.f32.gmra.mrb[0].mxu0 %v73
    %v434 = vpop.f32.mrb[0].mxu0
    %v435 = vadd.f32 %v106, %v434
    %v436 = vpop.f32.mrb[0].mxu0
    %437 = vmatprep.mubr.f32.mxu0 0.0
    %438 = vmatmul.mubr.f32.gmra.mrb[0].mxu0 %v74
    %v439 = vpop.f32.mrb[0].mxu0
    %v440 = vadd.f32 %v106, %v439
    %v441 = vpop.f32.mrb[0].mxu0
    %442 = vmatprep.mubr.f32.mxu0 0.0
    %443 = vmatmul.mubr.f32.gmra.mrb[0].mxu0 %v75
    %v444 = vpop.f32.mrb[0].mxu0
    %v445 = vadd.f32 %v106, %v444
    %v446 = vpop.f32.mrb[0].mxu0
    %447 = vmatprep.mubr.f32.mxu0 0.0
    %448 = vmatmul.mubr.f32.gmra.mrb[0].mxu0 %v76
    %v449 = vpop.f32.mrb[0].mxu0
    %v450 = vadd.f32 %v106, %v449
    %v451 = vpop.f32.mrb[0].mxu0
    %452 = vmatprep.mubr.f32.mxu0 0.0
    %453 = vmatmul.mubr.f32.gmra.mrb[0].mxu0 %v77
    %v454 = vpop.f32.mrb[0].mxu0
    %v455 = vadd.f32 %v106, %v454
    %v456 = vpop.f32.mrb[0].mxu0
    %457 = vmatprep.mubr.f32.mxu0 0.0
    %458 = vmatmul.mubr.f32.gmra.mrb[0].mxu0 %v78
    %v459 = vpop.f32.mrb[0].mxu0
    %v460 = vadd.f32 %v106, %v459
    %v461 = vpop.f32.mrb[0].mxu0
    %462 = vmatprep.mubr.f32.mxu0 0.0
    %463 = vmatmul.mubr.f32.gmra.mrb[0].mxu0 %v79
    %v464 = vpop.f32.mrb[0].mxu0
    %v465 = vadd.f32 %v106, %v464
    %v466 = vpop.f32.mrb[0].mxu0
    %467 = vmatprep.mubr.f32.mxu0 0.0
    %468 = vmatmul.mubr.f32.gmra.mrb[0].mxu0 %v80
    %v469 = vpop.f32.mrb[0].mxu0
    %v470 = vadd.f32 %v106, %v469
    %v471 = vpop.f32.mrb[0].mxu0
    %472 = vmatprep.mubr.f32.mxu0 0.0
    %473 = vmatmul.mubr.f32.gmra.mrb[0].mxu0 %v81
    %v474 = vpop.f32.mrb[0].mxu0
    %v475 = vadd.f32 %v106, %v474
    %v476 = vpop.f32.mrb[0].mxu0
    %477 = vmatprep.mubr.f32.mxu0 0.0
    %478 = vmatmul.mubr.f32.gmra.mrb[0].mxu0 %v82
    %v479 = vpop.f32.mrb[0].mxu0
    %v480 = vadd.f32 %v106, %v479
    %v481 = vpop.f32.mrb[0].mxu0
    %482 = vmatprep.mubr.f32.mxu0 0.0
    %483 = vmatmul.mubr.f32.gmra.mrb[0].mxu0 %v83
    %v484 = vpop.f32.mrb[0].mxu0
    %v485 = vadd.f32 %v106, %v484
    %v486 = vpop.f32.mrb[0].mxu0
    %487 = vmatprep.mubr.f32.mxu0 0.0
    %488 = vmatmul.mubr.f32.gmra.mrb[0].mxu0 %v84
    %v489 = vpop.f32.mrb[0].mxu0
    %v490 = vadd.f32 %v106, %v489
    %v491 = vpop.f32.mrb[0].mxu0
    %492 = vdwg.mxu0
    %v493 = vmax.f32 %v175, 0.0
    %v494 = vmax.f32 %v180, 0.0
    %v495 = vmax.f32 %v185, 0.0
    %v496 = vmax.f32 %v190, 0.0
    %v497 = vmax.f32 %v195, 0.0
    %v498 = vmax.f32 %v200, 0.0
    %v499 = vmax.f32 %v205, 0.0
    %v500 = vmax.f32 %v210, 0.0
    %v501 = vmax.f32 %v215, 0.0
    %v502 = vmax.f32 %v220, 0.0
    %v503 = vmax.f32 %v225, 0.0
    %v504 = vmax.f32 %v230, 0.0
    %v505 = vmax.f32 %v235, 0.0
    %v506 = vmax.f32 %v240, 0.0
    %v507 = vmax.f32 %v245, 0.0
    %v508 = vmax.f32 %v250, 0.0
    %v509 = vmax.f32 %v255, 0.0
    %v510 = vmax.f32 %v260, 0.0
    %v511 = vmax.f32 %v265, 0.0
    %v512 = vmax.f32 %v270, 0.0
    %v513 = vmax.f32 %v275, 0.0
    %v514 = vmax.f32 %v280, 0.0
    %v515 = vmax.f32 %v285, 0.0
    %v516 = vmax.f32 %v290, 0.0
    %v517 = vmax.f32 %v295, 0.0
    %v518 = vmax.f32 %v300, 0.0
    %v519 = vmax.f32 %v305, 0.0
    %v520 = vmax.f32 %v310, 0.0
    %v521 = vmax.f32 %v315, 0.0
    %v522 = vmax.f32 %v320, 0.0
    %v523 = vmax.f32 %v325, 0.0
    %v524 = vmax.f32 %v330, 0.0
    %v525 = vmax.f32 %v335, 0.0
    %v526 = vmax.f32 %v340, 0.0
    %v527 = vmax.f32 %v345, 0.0
    %v528 = vmax.f32 %v350, 0.0
    %v529 = vmax.f32 %v355, 0.0
    %v530 = vmax.f32 %v360, 0.0
    %v531 = vmax.f32 %v365, 0.0
    %v532 = vmax.f32 %v370, 0.0
    %v533 = vmax.f32 %v375, 0.0
    %v534 = vmax.f32 %v380, 0.0
    %v535 = vmax.f32 %v385, 0.0
    %v536 = vmax.f32 %v390, 0.0
    %v537 = vmax.f32 %v395, 0.0
    %v538 = vmax.f32 %v400, 0.0
    %v539 = vmax.f32 %v405, 0.0
    %v540 = vmax.f32 %v410, 0.0
    %v541 = vmax.f32 %v415, 0.0
    %v542 = vmax.f32 %v420, 0.0
    %v543 = vmax.f32 %v425, 0.0
    %v544 = vmax.f32 %v430, 0.0
    %v545 = vmax.f32 %v435, 0.0
    %v546 = vmax.f32 %v440, 0.0
    %v547 = vmax.f32 %v445, 0.0
    %v548 = vmax.f32 %v450, 0.0
    %v549 = vmax.f32 %v455, 0.0
    %v550 = vmax.f32 %v460, 0.0
    %v551 = vmax.f32 %v465, 0.0
    %v552 = vmax.f32 %v470, 0.0
    %v553 = vmax.f32 %v475, 0.0
    %v554 = vmax.f32 %v480, 0.0
    %v555 = vmax.f32 %v485, 0.0
    %v556 = vmax.f32 %v490, 0.0
    %v557 = vadd.f32 %v493, %v494
    %v558 = vadd.f32 %v557, %v495
    %v559 = vadd.f32 %v558, %v496
    %v560 = vadd.f32 %v559, %v497
    %v561 = vadd.f32 %v560, %v498
    %v562 = vadd.f32 %v561, %v499
    %v563 = vadd.f32 %v562, %v500
    %v564 = vadd.f32 %v563, %v501
    %v565 = vadd.f32 %v564, %v502
    %v566 = vadd.f32 %v565, %v503
    %v567 = vadd.f32 %v566, %v504
    %v568 = vadd.f32 %v567, %v505
    %v569 = vadd.f32 %v568, %v506
    %v570 = vadd.f32 %v569, %v507
    %v571 = vadd.f32 %v570, %v508
    %v572 = vadd.f32 %v571, %v509
    %v573 = vadd.f32 %v572, %v510
    %v574 = vadd.f32 %v573, %v511
    %v575 = vadd.f32 %v574, %v512
    %v576 = vadd.f32 %v575, %v513
    %v577 = vadd.f32 %v576, %v514
    %v578 = vadd.f32 %v577, %v515
    %v579 = vadd.f32 %v578, %v516
    %v580 = vadd.f32 %v579, %v517
    %v581 = vadd.f32 %v580, %v518
    %v582 = vadd.f32 %v581, %v519
    %v583 = vadd.f32 %v582, %v520
    %v584 = vadd.f32 %v583, %v521
    %v585 = vadd.f32 %v584, %v522
    %v586 = vadd.f32 %v585, %v523
    %v587 = vadd.f32 %v586, %v524
    %v588 = vrot.slane %v587, 4
    %v589 = vadd.f32 %v587, %v588
    %v590 = vrot.slane %v589, 2
    %v591 = vadd.f32 %v589, %v590
    %v592 = vrot.slane %v591, 1
    %v593 = vadd.f32 %v591, %v592
    %v594 = vadd.f32 %v525, %v526
    %v595 = vadd.f32 %v594, %v527
    %v596 = vadd.f32 %v595, %v528
    %v597 = vadd.f32 %v596, %v529
    %v598 = vadd.f32 %v597, %v530
    %v599 = vadd.f32 %v598, %v531
    %v600 = vadd.f32 %v599, %v532
    %v601 = vadd.f32 %v600, %v533
    %v602 = vadd.f32 %v601, %v534
    %v603 = vadd.f32 %v602, %v535
    %v604 = vadd.f32 %v603, %v536
    %v605 = vadd.f32 %v604, %v537
    %v606 = vadd.f32 %v605, %v538
    %v607 = vadd.f32 %v606, %v539
    %v608 = vadd.f32 %v607, %v540
    %v609 = vadd.f32 %v608, %v541
    %v610 = vadd.f32 %v609, %v542
    %v611 = vadd.f32 %v610, %v543
    %v612 = vadd.f32 %v611, %v544
    %v613 = vadd.f32 %v612, %v545
    %v614 = vadd.f32 %v613, %v546
    %v615 = vadd.f32 %v614, %v547
    %v616 = vadd.f32 %v615, %v548
    %v617 = vadd.f32 %v616, %v549
    %v618 = vadd.f32 %v617, %v550
    %v619 = vadd.f32 %v618, %v551
    %v620 = vadd.f32 %v619, %v552
    %v621 = vadd.f32 %v620, %v553
    %v622 = vadd.f32 %v621, %v554
    %v623 = vadd.f32 %v622, %v555
    %v624 = vadd.f32 %v623, %v556
    %v625 = vrot.slane %v624, 4
    %v626 = vadd.f32 %v624, %v625
    %v627 = vrot.slane %v626, 2
    %v628 = vadd.f32 %v626, %v627
    %v629 = vrot.slane %v628, 1
    %v630 = vadd.f32 %v628, %v629
    %v631 = vld [vmem:[%s3] sm:$0xff]
    %v632 = vld [vmem:[%s3 + $0x8] sm:$0xff]
    %v633 = vld [vmem:[%s3 + $0x10] sm:$0xff]
    %v634 = vld [vmem:[%s3 + $0x18] sm:$0xff]
    %v635 = vld [vmem:[%s3 + $0x20] sm:$0xff]
    %v636 = vld [vmem:[%s3 + $0x28] sm:$0xff]
    %v637 = vld [vmem:[%s3 + $0x30] sm:$0xff]
    %v638 = vld [vmem:[%s3 + $0x38] sm:$0xff]
    %v639 = vld [vmem:[%s3 + $0x40] sm:$0xff]
    %v640 = vld [vmem:[%s3 + $0x48] sm:$0xff]
    %v641 = vld [vmem:[%s3 + $0x50] sm:$0xff]
    %v642 = vld [vmem:[%s3 + $0x58] sm:$0xff]
    %v643 = vld [vmem:[%s3 + $0x60] sm:$0xff]
    %v644 = vld [vmem:[%s3 + $0x68] sm:$0xff]
    %v645 = vld [vmem:[%s3 + $0x70] sm:$0xff]
    %v646 = vld [vmem:[%s3 + $0x78] sm:$0xff]
    %v647 = vld [vmem:[%s4] sm:$0x1]
    %v649 = vlaneseq
    %v650 = vshrl.u32 %v649, 7
    %v651 = vsub.s32 0, %v650
    %v652 = vrot.slane %v647, %v651
    %vm656 = vcmask 1041409
    %v657 = vsel %vm656, %v630, %v593
    %659 = vmatprep.subr.mxu0 0.0
    %660 = vmatpush1.msra.mxu0 %v631
    %661 = vmatprep.subr.mxu0 0.0
    %662 = vmatpush1.msra.mxu0 %v632
    %663 = vmatprep.subr.mxu0 0.0
    %664 = vmatpush1.msra.mxu0 %v633
    %665 = vmatprep.subr.mxu0 0.0
    %666 = vmatpush1.msra.mxu0 %v634
    %667 = vmatprep.subr.mxu0 0.0
    %668 = vmatpush1.msra.mxu0 %v635
    %669 = vmatprep.subr.mxu0 0.0
    %670 = vmatpush1.msra.mxu0 %v636
    %671 = vmatprep.subr.mxu0 0.0
    %672 = vmatpush1.msra.mxu0 %v637
    %673 = vmatprep.subr.mxu0 0.0
    %674 = vmatpush1.msra.mxu0 %v638
    %675 = vmatprep.subr.mxu0 0.0
    %676 = vmatpush1.msra.mxu0 %v639
    %677 = vmatprep.subr.mxu0 0.0
    %678 = vmatpush1.msra.mxu0 %v640
    %679 = vmatprep.subr.mxu0 0.0
    %680 = vmatpush1.msra.mxu0 %v641
    %681 = vmatprep.subr.mxu0 0.0
    %682 = vmatpush1.msra.mxu0 %v642
    %683 = vmatprep.subr.mxu0 0.0
    %684 = vmatpush1.msra.mxu0 %v643
    %685 = vmatprep.subr.mxu0 0.0
    %686 = vmatpush1.msra.mxu0 %v644
    %687 = vmatprep.subr.mxu0 0.0
    %688 = vmatpush1.msra.mxu0 %v645
    %689 = vmatprep.subr.mxu0 0.0
    %690 = vmatpush1.msra.mxu0 %v646
    %691 = vmatprep.subr.mxu0 0.0
    %692 = vmatpush1.msra.mxu0 0.0
    %693 = vmatprep.subr.mxu0 0.0
    %694 = vmatpush1.msra.mxu0 0.0
    %695 = vmatprep.subr.mxu0 0.0
    %696 = vmatpush1.msra.mxu0 0.0
    %697 = vmatprep.subr.mxu0 0.0
    %698 = vmatpush1.msra.mxu0 0.0
    %699 = vmatprep.subr.mxu0 0.0
    %700 = vmatpush1.msra.mxu0 0.0
    %701 = vmatprep.subr.mxu0 0.0
    %702 = vmatpush1.msra.mxu0 0.0
    %703 = vmatprep.subr.mxu0 0.0
    %704 = vmatpush1.msra.mxu0 0.0
    %705 = vmatprep.subr.mxu0 0.0
    %706 = vmatpush1.msra.mxu0 0.0
    %707 = vmatprep.subr.mxu0 0.0
    %708 = vmatpush1.msra.mxu0 0.0
    %709 = vmatprep.subr.mxu0 0.0
    %710 = vmatpush1.msra.mxu0 0.0
    %711 = vmatprep.subr.mxu0 0.0
    %712 = vmatpush1.msra.mxu0 0.0
    %713 = vmatprep.subr.mxu0 0.0
    %714 = vmatpush1.msra.mxu0 0.0
    %715 = vmatprep.subr.mxu0 0.0
    %716 = vmatpush1.msra.mxu0 0.0
    %717 = vmatprep.subr.mxu0 0.0
    %718 = vmatpush1.msra.mxu0 0.0
    %719 = vmatprep.subr.mxu0 0.0
    %720 = vmatpush1.msra.mxu0 0.0
    %721 = vmatprep.subr.mxu0 0.0
    %722 = vmatpush1.msra.mxu0 0.0
    %723 = vmatprep.mubr.f32.mxu0 0.0
    %724 = vmatmul.mubr.f32.gmra.mrb[0].mxu0 %v657
    %v725 = vpop.f32.mrb[0].mxu0
    %v726 = vadd.f32 %v652, %v725
    %v727 = vpop.f32.mrb[0].mxu0
    %728 = vdwg.mxu0
    %729 = vst [vmem:[#allocation2] sm:$0x3] %v726
    // Predicated region
    $region22: #{single_forward.1} parent=1 // pred_check
      _
    $region23: #{single_forward.1} parent=1 // pred_check_branch
      %731 = sbr.rel (0) target = $region25
    $region24: #{single_forward.1} parent=1 // pred_region
      %s733 = ssub.s32 32, 32
      %734 = vsyncadd [#allocation3], %s733
      %s736 = sshll.u32 [#allocation2], 4
      %s737 = int_to_ptr.vmem [resolvable:$true] %s736
      %739 = dma.vmem_to_hbm [thread:$0]  %s737, 32, %s5, [#allocation3]
    $region25: #{single_forward.1} parent=1 // pred_fallthru
      _
    // Predicated region
    $region26: #{single_forward.1} parent=1 // pred_check
      _
    $region27: #{single_forward.1} parent=1 // pred_check_branch
      %741 = sbr.rel (0) target = $region29
    $region28: #{single_forward.1} parent=1 // pred_region
      %742 = dma.done [#allocation3], 32
    $region29: #{single_forward.1} parent=1 // pred_fallthru
      _
    %743 = vsyncpa [#allocation3], 1

</llo_original>
